<compile_context>
chip_gen: v6e
topology: v6e:2x2x1
jax: 0.10.0
libtpu: 0.0.40
codegen_flags: <defaults>
</compile_context>

<pallas_src>
import jax
import jax.numpy as jnp
from jax.experimental import pallas as pl
from jax.experimental.pallas import tpu as pltpu

_EPS = 1e-6
_LANES = 128
_TARGET_BLOCK_BYTES = 4 * 1024 * 1024   # per-input VMEM tile (x2 inputs x2 buffers = 16 MiB)
_VMEM_LIMIT_BYTES = 32 * 1024 * 1024    # headroom over v5e's 16 MiB scoped default
_CHUNK_VREGS = 8                        # ~8 f32 vregs per operand per inner chunk


def _make_charbonnier_kernel(block_rows: int, chunk_rows: int, cols: int):
    """out[0] = column-wise sum of sqrt((x - y)^2 + eps) over a (block_rows, cols) tile."""
    n_full, rem = divmod(block_rows, chunk_rows)
    aligned = (chunk_rows % 8 == 0)

    def kernel(x_ref, y_ref, out_ref):
        def chunk_sum(off, nrows):
            x = x_ref[pl.ds(off, nrows), :].astype(jnp.float32)
            y = y_ref[pl.ds(off, nrows), :].astype(jnp.float32)
            d = x - y
            err = jnp.sqrt(d * d + jnp.float32(_EPS))      # sqrt -> EUP slot (free-ish)
            return jnp.sum(err, axis=0, keepdims=True)     # (1, cols) partial

        acc = jnp.zeros((1, cols), jnp.float32)
        if n_full > 0:
            if n_full <= 8:
                # Short trip count: static unroll gives the LLO scheduler full visibility.
                for k in range(n_full):
                    acc = acc + chunk_sum(k * chunk_rows, chunk_rows)
            else:
                def body(k, a):
                    off = k * chunk_rows
                    if aligned:
                        off = pl.multiple_of(off, 8)
                    return a + chunk_sum(off, chunk_rows)
                acc = jax.lax.fori_loop(0, n_full, body, acc)
        if rem:
            acc = acc + chunk_sum(n_full * chunk_rows, rem)
        out_ref[0] = acc

    return kernel


def _pick_cols(n: int, natural_last: int) -> int:
    """Pick a lane-friendly last dim that divides n (so the reshape is a free view)."""
    for c in (512, 384, 256, 128, 64, 32, 16, 8):
        if n % c == 0:
            return c
    return natural_last  # always divides n


def _charbonnier_sum(x, y):
    """sum(sqrt((x - y)^2 + eps)) over all elements, accumulated in f32.

    Single streaming pallas_call over both operands (no host padding/concatenation);
    a tiny ragged row tail (if any) is folded in with plain jnp.
    """
    assert x.shape == y.shape, (x.shape, y.shape)
    n = int(x.size)
    cols = _pick_cols(n, int(x.shape[-1]))
    rows = n // cols
    x2 = x.reshape(rows, cols)   # contiguous view: free bitcast, no HBM pass
    y2 = y.reshape(rows, cols)

    # Block rows: biggest tile within the VMEM budget (padded lane footprint).
    itemsize = max(x.dtype.itemsize, y.dtype.itemsize)
    padded_row_bytes = ((cols + _LANES - 1) // _LANES) * _LANES * itemsize
    max_tr = max(8, (_TARGET_BLOCK_BYTES // padded_row_bytes) // 8 * 8)

    if rows <= max_tr:
        tr = rows                         # single block == full dim (no 8-divisibility needed)
    else:
        nb0 = -(-rows // max_tr)          # cdiv
        tr = max(8, (rows // nb0) // 8 * 8)
    nb = max(1, rows // tr)
    main_rows = nb * tr                   # rows beyond this go to the tiny jnp tail

    # Inner chunk: ~_CHUNK_VREGS f32 vregs per operand so nothing spills.
    lane_groups = max(1, -(-cols // _LANES))
    chunk_rows = max(8, ((_CHUNK_VREGS * 8) // lane_groups) // 8 * 8)
    chunk_rows = min(chunk_rows, tr)

    partials = pl.pallas_call(
        _make_charbonnier_kernel(tr, chunk_rows, cols),
        out_shape=jax.ShapeDtypeStruct((nb, 1, cols), jnp.float32),
        grid=(nb,),
        in_specs=[
            pl.BlockSpec((tr, cols), lambda i: (i, 0)),
            pl.BlockSpec((tr, cols), lambda i: (i, 0)),
        ],
        out_specs=pl.BlockSpec((1, 1, cols), lambda i: (i, 0, 0)),
        compiler_params=pltpu.CompilerParams(
            dimension_semantics=("parallel",),   # v7x: shard blocks across both TCs
            vmem_limit_bytes=_VMEM_LIMIT_BYTES,
        ),
    )(x2, y2)

    total = jnp.sum(partials)

    if main_rows < rows:
        # Ragged tail (< 8 * nb rows): XLA fuses this into one small read, no big pass.
        dt = x2[main_rows:].astype(jnp.float32) - y2[main_rows:].astype(jnp.float32)
        total = total + jnp.sum(jnp.sqrt(dt * dt + jnp.float32(_EPS)))
    return total


def multi_scale_supervision_loss(preds, gt):
    """JAX/Pallas equivalent of MultiScaleSupervisionLoss.forward(preds, gt)."""
    weights = (0.5, 0.5)  # matches the module (like the module, supports up to 2 preds)
    loss = jnp.float32(0.0)
    for i, pred in enumerate(preds):
        stride = 2 ** (i + 1)
        # F.interpolate(gt, scale_factor=0.5**(i+1), mode='nearest') == gt[:, :, ::s, ::s]
        # (exact when H and W are divisible by the stride; the shape assert guards this).
        # TODO(synk): fuse this downsample into the kernel DMA (see header comment).
        gt_ds = gt[:, :, ::stride, ::stride]
        assert pred.shape == gt_ds.shape, (pred.shape, gt_ds.shape)
        s = _charbonnier_sum(pred, gt_ds)
        loss = loss + jnp.float32(weights[i]) * s / jnp.float32(pred.size)
    return loss


def _reference_loss(preds, gt):
    # Pure-JAX reference mirroring the PyTorch module.
    weights = (0.5, 0.5)
    total = 0.0
    for i, pred in enumerate(preds):
        s = 2 ** (i + 1)
        gt_ds = gt[:, :, ::s, ::s]
        diff = pred - gt_ds
        total = total + weights[i] * jnp.mean(jnp.sqrt(diff * diff + _EPS))
    return total


if __name__ == "__main__":
    key = jax.random.PRNGKey(0)
    k_gt, k_p0, k_p1 = jax.random.split(key, 3)

    # gt is NCHW; preds are at 1/2 and 1/4 spatial resolution.
    gt = jax.random.normal(k_gt, (2, 4, 16, 16), dtype=jnp.float32)
    preds = [
        jax.random.normal(k_p0, (2, 4, 8, 8), dtype=jnp.float32),
        jax.random.normal(k_p1, (2, 4, 4, 4), dtype=jnp.float32),
    ]

    loss_fn = jax.jit(multi_scale_supervision_loss)
    loss = jax.block_until_ready(loss_fn(preds, gt))
    ref = jax.block_until_ready(_reference_loss(preds, gt))

    assert jnp.allclose(loss, ref, atol=1e-5, rtol=1e-5), (loss, ref)
    print("KERNEL_OK")
</pallas_src>

<mosaic_0001>
module attributes {stable_mosaic.version = 11 : i64} {
  func.func @kernel(%arg0: i32, %arg1: memref<1x512xf32, #tpu.memory_space<vmem>>, %arg2: memref<1x512xf32, #tpu.memory_space<vmem>>, %arg3: memref<1x1x512xf32, #tpu.memory_space<vmem>>) attributes {dimension_semantics = [#tpu.dimension_semantics<parallel>], iteration_bounds = array<i64: 1>, scalar_prefetch = 0 : i64, scratch_operands = 0 : i64, tpu.core_type = #tpu.core_type<tc>, window_params = [{transform_indices = @transform_0, window_bounds = array<i64: 1, 512>}, {transform_indices = @transform_1, window_bounds = array<i64: 1, 512>}, {transform_indices = @transform_2, window_bounds = array<i64: 1, 1, 512>}]} {
    %cst = arith.constant 0.000000e+00 : f32
    %0 = vector.broadcast %cst : f32 to vector<1x512xf32>
    %c0 = arith.constant 0 : index
    %c0_0 = arith.constant 0 : index
    %1 = vector.load %arg1[%c0, %c0_0] : memref<1x512xf32, #tpu.memory_space<vmem>>, vector<1x512xf32>
    %c0_1 = arith.constant 0 : index
    %c0_2 = arith.constant 0 : index
    %2 = vector.load %arg2[%c0_1, %c0_2] : memref<1x512xf32, #tpu.memory_space<vmem>>, vector<1x512xf32>
    %3 = arith.subf %1, %2 : vector<1x512xf32>
    %4 = arith.mulf %3, %3 : vector<1x512xf32>
    %cst_3 = arith.constant 9.99999997E-7 : f32
    %5 = vector.broadcast %cst_3 : f32 to vector<1x512xf32>
    %6 = arith.addf %4, %5 : vector<1x512xf32>
    %7 = math.sqrt %6 : vector<1x512xf32>
    %cst_4 = arith.constant dense<0.000000e+00> : vector<512xf32>
    %8 = vector.multi_reduction <add>, %7, %cst_4 [0] : vector<1x512xf32> to vector<512xf32>
    %9 = vector.shape_cast %8 : vector<512xf32> to vector<1x512xf32>
    %10 = arith.addf %0, %9 : vector<1x512xf32>
    %c0_5 = arith.constant 0 : index
    %c0_6 = arith.constant 0 : index
    %c0_7 = arith.constant 0 : index
    %11 = vector.load %arg3[%c0_5, %c0_6, %c0_7] : memref<1x1x512xf32, #tpu.memory_space<vmem>>, vector<1x1x512xf32>
    %12 = vector.shape_cast %11 : vector<1x1x512xf32> to vector<1x512xf32>
    %13 = vector.shape_cast %10 : vector<1x512xf32> to vector<1x1x512xf32>
    tpu.vector_store %arg3[%c0_5, %c0_6, %c0_7], %13 {strides = array<i32>} : memref<1x1x512xf32, #tpu.memory_space<vmem>>, vector<1x1x512xf32>,
    return
  }
  func.func @transform_0(%arg0: i32) -> (i32, i32) {
    %c0_i32 = arith.constant 0 : i32
    %c0_i32_0 = arith.constant 0 : i32
    return %arg0, %c0_i32 : i32, i32
  }
  func.func @transform_1(%arg0: i32) -> (i32, i32) {
    %c0_i32 = arith.constant 0 : i32
    %c0_i32_0 = arith.constant 0 : i32
    return %arg0, %c0_i32 : i32, i32
  }
  func.func @transform_2(%arg0: i32) -> (i32, i32, i32) {
    %c0_i32 = arith.constant 0 : i32
    %c0_i32_0 = arith.constant 0 : i32
    %c0_i32_1 = arith.constant 0 : i32
    return %arg0, %c0_i32, %c0_i32_0 : i32, i32, i32
  }
}

module attributes {stable_mosaic.version = 11 : i64} {
  func.func @kernel(%arg0: i32, %arg1: memref<1x128xf32, #tpu.memory_space<vmem>>, %arg2: memref<1x128xf32, #tpu.memory_space<vmem>>, %arg3: memref<1x1x128xf32, #tpu.memory_space<vmem>>) attributes {dimension_semantics = [#tpu.dimension_semantics<parallel>], iteration_bounds = array<i64: 1>, scalar_prefetch = 0 : i64, scratch_operands = 0 : i64, tpu.core_type = #tpu.core_type<tc>, window_params = [{transform_indices = @transform_0, window_bounds = array<i64: 1, 128>}, {transform_indices = @transform_1, window_bounds = array<i64: 1, 128>}, {transform_indices = @transform_2, window_bounds = array<i64: 1, 1, 128>}]} {
    %cst = arith.constant 0.000000e+00 : f32
    %0 = vector.broadcast %cst : f32 to vector<1x128xf32>
    %c0 = arith.constant 0 : index
    %c0_0 = arith.constant 0 : index
    %1 = vector.load %arg1[%c0, %c0_0] : memref<1x128xf32, #tpu.memory_space<vmem>>, vector<1x128xf32>
    %c0_1 = arith.constant 0 : index
    %c0_2 = arith.constant 0 : index
    %2 = vector.load %arg2[%c0_1, %c0_2] : memref<1x128xf32, #tpu.memory_space<vmem>>, vector<1x128xf32>
    %3 = arith.subf %1, %2 : vector<1x128xf32>
    %4 = arith.mulf %3, %3 : vector<1x128xf32>
    %cst_3 = arith.constant 9.99999997E-7 : f32
    %5 = vector.broadcast %cst_3 : f32 to vector<1x128xf32>
    %6 = arith.addf %4, %5 : vector<1x128xf32>
    %7 = math.sqrt %6 : vector<1x128xf32>
    %cst_4 = arith.constant dense<0.000000e+00> : vector<128xf32>
    %8 = vector.multi_reduction <add>, %7, %cst_4 [0] : vector<1x128xf32> to vector<128xf32>
    %9 = vector.shape_cast %8 : vector<128xf32> to vector<1x128xf32>
    %10 = arith.addf %0, %9 : vector<1x128xf32>
    %c0_5 = arith.constant 0 : index
    %c0_6 = arith.constant 0 : index
    %c0_7 = arith.constant 0 : index
    %11 = vector.load %arg3[%c0_5, %c0_6, %c0_7] : memref<1x1x128xf32, #tpu.memory_space<vmem>>, vector<1x1x128xf32>
    %12 = vector.shape_cast %11 : vector<1x1x128xf32> to vector<1x128xf32>
    %13 = vector.shape_cast %10 : vector<1x128xf32> to vector<1x1x128xf32>
    tpu.vector_store %arg3[%c0_5, %c0_6, %c0_7], %13 {strides = array<i32>} : memref<1x1x128xf32, #tpu.memory_space<vmem>>, vector<1x1x128xf32>,
    return
  }
  func.func @transform_0(%arg0: i32) -> (i32, i32) {
    %c0_i32 = arith.constant 0 : i32
    %c0_i32_0 = arith.constant 0 : i32
    return %arg0, %c0_i32 : i32, i32
  }
  func.func @transform_1(%arg0: i32) -> (i32, i32) {
    %c0_i32 = arith.constant 0 : i32
    %c0_i32_0 = arith.constant 0 : i32
    return %arg0, %c0_i32 : i32, i32
  }
  func.func @transform_2(%arg0: i32) -> (i32, i32, i32) {
    %c0_i32 = arith.constant 0 : i32
    %c0_i32_0 = arith.constant 0 : i32
    %c0_i32_1 = arith.constant 0 : i32
    return %arg0, %c0_i32, %c0_i32_0 : i32, i32, i32
  }
}

</mosaic_0001>

<llo_original>
// kernel: multi_scale_supervision_loss.2
$region0: #{multi_scale_supervision_loss.2}
  #allocation0 [shape = 'u32[]', space=smem, size = 0x4, offset = 0x4, fixed_abs, tag = 'smem constant byte address 0x4 - core index']
  #allocation1 [shape = 'u32[144,128]{1,0:T(1,128)}', space=vmem, size = 0x12000, scoped, tag = 'internal scratch']
  %s0 = inlined_call_operand.vmem [shape: f32[1,512], index: 0, kind: input, shape index: {}]
  %s1 = inlined_call_operand.vmem [shape: f32[1,512], index: 1, kind: input, shape index: {}]
  %s2 = inlined_call_operand.vmem [shape: f32[1,1,512], index: 2, kind: output, shape index: {}]
  %s3 = sld [smem:[#allocation0]]
  $region18: #{multi_scale_supervision_loss.2} parent=0
    _
  %s5 = ssub.s32 1, %s3
  %s6 = scalar_select 0, %s5, %s3
  // Predicated region
  $region2: #{multi_scale_supervision_loss.2} parent=0 // pred_check
    _
  $region3: #{multi_scale_supervision_loss.2} parent=0 // pred_check_branch
    %8 = sbr.rel (0) target = $region5
  $region4: #{multi_scale_supervision_loss.2} parent=0 // pred_region
    _
  $region5: #{multi_scale_supervision_loss.2} parent=0 // pred_fallthru
    _
  // Predicated region
  $region6: #{multi_scale_supervision_loss.2} parent=0 // pred_check
    _
  $region7: #{multi_scale_supervision_loss.2} parent=0 // pred_check_branch
    %10 = sbr.rel (0) target = $region9
  $region8: #{multi_scale_supervision_loss.2} parent=0 // pred_region
    _
  $region9: #{multi_scale_supervision_loss.2} parent=0 // pred_fallthru
    _
  %v11 = vld [vmem:[%s0] sm:$0xf]
  %v12 = vld [vmem:[%s1] sm:$0xf]
  %v13 = vsub.f32 %v11, %v12
  %v14 = vmul.f32 %v13, %v13
  %v15 = vadd.f32 %v14, 1e-06
  %v16 = vrsqrt.pop %v15
  %v17 = vmul.f32 %v15, %v16
  %vm18 = vcmp.eq.f32.partialorder %v15, inf
  %v19 = vsel %vm18, %v15, %v17
  %vm20 = vcmp.eq.f32.partialorder %v15, 0.0
  %v21 = vand.u32 %v15, 2147483648
  %v22 = vsel %vm20, %v21, %v19
  %v23 = vadd.f32 %v22, 0.0
  %v24 = vadd.f32 %v23, 0.0
  %v25 = vlaneseq
  %vm26 = vcmp.ge.s32.totalorder %v25, 0
  %vm27 = vcmp.lt.s32.totalorder %v25, 512
  %vm28 = vmand %vm26, %vm27
  %29 = vst.msk [vmem:[%s2] sm:$0xf] %vm28, %v24
  // Predicated region
  $region10: #{multi_scale_supervision_loss.2} parent=0 // pred_check
    _
  $region11: #{multi_scale_supervision_loss.2} parent=0 // pred_check_branch
    %31 = sbr.rel (0) target = $region13
  $region12: #{multi_scale_supervision_loss.2} parent=0 // pred_region
    _
  $region13: #{multi_scale_supervision_loss.2} parent=0 // pred_fallthru
    _
  // Predicated region
  $region14: #{multi_scale_supervision_loss.2} parent=0 // pred_check
    _
  $region15: #{multi_scale_supervision_loss.2} parent=0 // pred_check_branch
    %33 = sbr.rel (0) target = $region17
  $region16: #{multi_scale_supervision_loss.2} parent=0 // pred_region
    _
  $region17: #{multi_scale_supervision_loss.2} parent=0 // pred_fallthru
    _

// kernel: multi_scale_supervision_loss.3
$region0: #{multi_scale_supervision_loss.3}
  #allocation0 [shape = 'u32[]', space=smem, size = 0x4, offset = 0x4, fixed_abs, tag = 'smem constant byte address 0x4 - core index']
  #allocation1 [shape = 'u32[144,128]{1,0:T(1,128)}', space=vmem, size = 0x12000, scoped, tag = 'internal scratch']
  %s0 = inlined_call_operand.vmem [shape: f32[1,128], index: 0, kind: input, shape index: {}]
  %s1 = inlined_call_operand.vmem [shape: f32[1,128], index: 1, kind: input, shape index: {}]
  %s2 = inlined_call_operand.vmem [shape: f32[1,1,128], index: 2, kind: output, shape index: {}]
  %s3 = sld [smem:[#allocation0]]
  $region18: #{multi_scale_supervision_loss.3} parent=0
    _
  %s5 = ssub.s32 1, %s3
  %s6 = scalar_select 0, %s5, %s3
  // Predicated region
  $region2: #{multi_scale_supervision_loss.3} parent=0 // pred_check
    _
  $region3: #{multi_scale_supervision_loss.3} parent=0 // pred_check_branch
    %8 = sbr.rel (0) target = $region5
  $region4: #{multi_scale_supervision_loss.3} parent=0 // pred_region
    _
  $region5: #{multi_scale_supervision_loss.3} parent=0 // pred_fallthru
    _
  // Predicated region
  $region6: #{multi_scale_supervision_loss.3} parent=0 // pred_check
    _
  $region7: #{multi_scale_supervision_loss.3} parent=0 // pred_check_branch
    %10 = sbr.rel (0) target = $region9
  $region8: #{multi_scale_supervision_loss.3} parent=0 // pred_region
    _
  $region9: #{multi_scale_supervision_loss.3} parent=0 // pred_fallthru
    _
  %v11 = vld [vmem:[%s0] sm:$0x1]
  %v12 = vld [vmem:[%s1] sm:$0x1]
  %v13 = vsub.f32 %v11, %v12
  %v14 = vmul.f32 %v13, %v13
  %v15 = vadd.f32 %v14, 1e-06
  %v16 = vrsqrt.pop %v15
  %v17 = vmul.f32 %v15, %v16
  %vm18 = vcmp.eq.f32.partialorder %v15, inf
  %v19 = vsel %vm18, %v15, %v17
  %vm20 = vcmp.eq.f32.partialorder %v15, 0.0
  %v21 = vand.u32 %v15, 2147483648
  %v22 = vsel %vm20, %v21, %v19
  %v23 = vadd.f32 %v22, 0.0
  %v24 = vadd.f32 %v23, 0.0
  %25 = vst [vmem:[%s2] sm:$0x1] %v24
  // Predicated region
  $region10: #{multi_scale_supervision_loss.3} parent=0 // pred_check
    _
  $region11: #{multi_scale_supervision_loss.3} parent=0 // pred_check_branch
    %27 = sbr.rel (0) target = $region13
  $region12: #{multi_scale_supervision_loss.3} parent=0 // pred_region
    _
  $region13: #{multi_scale_supervision_loss.3} parent=0 // pred_fallthru
    _
  // Predicated region
  $region14: #{multi_scale_supervision_loss.3} parent=0 // pred_check
    _
  $region15: #{multi_scale_supervision_loss.3} parent=0 // pred_check_branch
    %29 = sbr.rel (0) target = $region17
  $region16: #{multi_scale_supervision_loss.3} parent=0 // pred_region
    _
  $region17: #{multi_scale_supervision_loss.3} parent=0 // pred_fallthru
    _

</llo_original>
